<compile_context>
chip_gen: v7x
topology: tpu7x:2x2x1
jax: 0.10.0
libtpu: 0.0.40
codegen_flags: <defaults>
</compile_context>

<pallas_src>
import numpy as np
import jax
import jax.numpy as jnp
from jax.experimental import pallas as pl
from jax.experimental.pallas import tpu as pltpu

BN_EPS = 1e-5
LANES = 128  # lane width; feature dims are zero-padded to this on the output side


def _round_up(n, m):
    return ((n + m - 1) // m) * m


def make_toy_model_kernel(num_hidden_layers, inp_size, kpad, batch):
    """Builds a Pallas kernel running the whole MLP in VMEM.

    Ref order: x (B, inp), w_slab (H, KPAD, 128), p_slab (2H+2, 128), out (B, 1).
    p_slab rows: [gamma_0, beta_0, gamma_1, beta_1, ..., w_last_row, b_last_row]
    """
    H = num_hidden_layers
    assert H >= 1, "kernel expects at least one hidden Linear->BN->ReLU block"
    inv_b = 1.0 / float(batch)  # static at trace time

    def kernel(x_ref, w_ref, p_ref, o_ref):
        # First hidden Linear on the MXU: the raw (B, inp) input is contracted
        # against the first `inp_size` rows of the padded weight tile — no
        # host-side pad needed.  Hidden biases are intentionally omitted: a
        # bias added immediately before BatchNorm is a mathematical no-op.
        x = x_ref[...].astype(jnp.float32)                       # (B, inp)
        h = jnp.dot(x, w_ref[0, :inp_size, :],
                    preferred_element_type=jnp.float32)          # (B, 128)

        # Static Python loop is fine for H = 2-3; switch to lax.fori_loop with
        # unroll=True if H ever grows beyond ~8 (vreg-pressure concern only).
        for i in range(H):
            if i > 0:
                # Only the first `kpad` lanes of h can be non-zero (gamma/beta
                # pads are 0, so padded lanes stay exactly 0 through BN/ReLU),
                # hence a kpad-row contraction is exact and cuts MXU weight
                # push + weight DMA by ~(128 / kpad)x.
                h = jnp.dot(h[:, :kpad], w_ref[i],
                            preferred_element_type=jnp.float32)  # (B, 128)

            # BatchNorm1d (training mode: batch mean, biased batch variance),
            # single-pass stats (two INDEPENDENT sublane reductions), folded to
            # one scale/shift and fused with ReLU.
            gamma = p_ref[2 * i:2 * i + 1, :]      # (1, 128); padded lanes == 0
            beta = p_ref[2 * i + 1:2 * i + 2, :]   # (1, 128); padded lanes == 0
            s1 = jnp.sum(h, axis=0, keepdims=True)
            s2 = jnp.sum(h * h, axis=0, keepdims=True)
            mean = s1 * inv_b
            var = jnp.maximum(s2 * inv_b - mean * mean, 0.0)  # clamp cancellation
            scale = gamma * jax.lax.rsqrt(var + BN_EPS)       # EUP rsqrt, VPU mul
            shift = beta - mean * scale
            h = jnp.maximum(h * scale + shift, 0.0)           # padded lanes stay 0

        # Final Linear(fin, 1): VPU multiply + XLU lane reduction — avoids an
        # MXU matmul with a 1-wide output.
        w_last = p_ref[2 * H:2 * H + 1, :]          # (1, 128); padded lanes == 0
        b_last = p_ref[2 * H + 1:2 * H + 2, 0:1]    # (1, 1)
        o_ref[...] = jnp.sum(h * w_last, axis=-1, keepdims=True) + b_last

    return kernel


def pack_params(params):
    """Pack the flat [W,b,gamma,beta]*H + [W_last, b_last] list into two
    lane-dense slabs (hidden biases are dropped — they cancel inside BN).

    Returns (w_slab (H, KPAD, 128), p_slab (2H+2, 128)) with
    KPAD = round_up(max hidden fan-in, 8).
    """
    H = (len(params) - 2) // 4
    fins = [np.asarray(params[4 * i]).shape[0] for i in range(H)]
    kpad = _round_up(max(fins), 8)

    w_slab = np.zeros((H, kpad, LANES), np.float32)
    p_slab = np.zeros((2 * H + 2, LANES), np.float32)
    for i in range(H):
        w, _b, gamma, beta = params[4 * i:4 * i + 4]
        fin, fout = w.shape
        w_slab[i, :fin, :fout] = np.asarray(w, np.float32)
        p_slab[2 * i, :fout] = np.asarray(gamma, np.float32).reshape(-1)
        p_slab[2 * i + 1, :fout] = np.asarray(beta, np.float32).reshape(-1)
    w_last, b_last = params[-2], params[-1]
    fin = np.asarray(w_last).shape[0]
    p_slab[2 * H, :fin] = np.asarray(w_last, np.float32).reshape(-1)
    p_slab[2 * H + 1, 0] = float(np.asarray(b_last, np.float32).reshape(-1)[0])
    return jnp.asarray(w_slab), jnp.asarray(p_slab)


def toy_model_forward(x, w_slab, p_slab):
    """Run the packed ToyModel forward pass. x: (batch, inp_size), float32."""
    H = int(w_slab.shape[0])
    kpad = int(w_slab.shape[1])
    batch, inp = x.shape

    kernel = make_toy_model_kernel(H, inp, kpad, batch)
    vmem = pl.BlockSpec(memory_space=pltpu.MemorySpace.VMEM)
    return pl.pallas_call(
        kernel,
        out_shape=jax.ShapeDtypeStruct((batch, 1), jnp.float32),
        in_specs=[vmem, vmem, vmem],
        out_specs=vmem,
        compiler_params=pltpu.CompilerParams(
            # Footprint here is tiny (x 0.5 KiB + weights ~24 KiB + params 3 KiB),
            # but make the limit explicit so nothing silently depends on a
            # generation-specific scoped-VMEM default (v7x: 64 MiB physical,
            # 32 MiB scoped default) if the batch-resident design is scaled up.
            vmem_limit_bytes=16 * 1024 * 1024,
        ),
    )(x, w_slab, p_slab)


def init_params(key, inp_size, hid_size, num_layers):
    """Deterministic init matching PyTorch shapes; weights stored (in, out)."""
    dims = np.linspace(inp_size, hid_size, num_layers + 1).astype(int).tolist()
    pairs = [(dims[i], dims[i + 1]) for i in range(len(dims) - 1)]

    params = []
    for i in range(num_layers - 1):
        fin, fout = pairs[i]
        key, k1, k2 = jax.random.split(key, 3)
        bound = 1.0 / np.sqrt(fin)
        w = jax.random.uniform(k1, (fin, fout), jnp.float32, -bound, bound)
        b = jax.random.uniform(k2, (1, fout), jnp.float32, -bound, bound)
        gamma = jnp.ones((1, fout), jnp.float32)
        beta = jnp.zeros((1, fout), jnp.float32)
        params += [w, b, gamma, beta]

    fin = pairs[num_layers - 1][0]
    key, k1, k2 = jax.random.split(key, 3)
    bound = 1.0 / np.sqrt(fin)
    w_last = jax.random.uniform(k1, (fin, 1), jnp.float32, -bound, bound)
    b_last = jax.random.uniform(k2, (1, 1), jnp.float32, -bound, bound)
    params += [w_last, b_last]
    return params


def reference_forward(x, params):
    """Pure-JAX reference identical to the PyTorch forward (biases included,
    two-pass BN statistics)."""
    H = (len(params) - 2) // 4
    h = x.astype(jnp.float32)
    idx = 0
    for _ in range(H):
        w, b, gamma, beta = params[idx:idx + 4]
        idx += 4
        h = h @ w + b
        mean = jnp.mean(h, axis=0, keepdims=True)
        var = jnp.mean(jnp.square(h - mean), axis=0, keepdims=True)
        h = (h - mean) / jnp.sqrt(var + BN_EPS) * gamma + beta
        h = jnp.maximum(h, 0.0)
    w_last, b_last = params[idx], params[idx + 1]
    return h @ w_last + b_last


if __name__ == "__main__":
    # ToyModel(inp_size=16, hid_size=32, num_layers=3, include_bn=True)
    inp_size, hid_size, num_layers = 16, 32, 3
    batch = 8  # multiple of 8 (f32 sublanes); BN stats use this whole batch in-kernel

    key = jax.random.PRNGKey(0)
    kx, kp = jax.random.split(key)
    x = jax.random.normal(kx, (batch, inp_size), dtype=jnp.float32)
    params = init_params(kp, inp_size, hid_size, num_layers)

    w_slab, p_slab = pack_params(params)
    risk = toy_model_forward(x, w_slab, p_slab)
    jax.block_until_ready(risk)

    assert risk.shape == (batch, 1), risk.shape

    risk_ref = reference_forward(x, params)
    assert jnp.allclose(risk, risk_ref, atol=1e-4, rtol=1e-4), (
        "Pallas output mismatch vs JAX reference"
    )

    print("KERNEL_OK")
</pallas_src>

<mosaic_0001>
module attributes {stable_mosaic.version = 11 : i64} {
  func.func @kernel(%arg0: memref<8x16xf32, #tpu.memory_space<vmem>>, %arg1: memref<2x24x128xf32, #tpu.memory_space<vmem>>, %arg2: memref<6x128xf32, #tpu.memory_space<vmem>>, %arg3: memref<8x1xf32, #tpu.memory_space<vmem>>) attributes {dimension_semantics = [], scalar_prefetch = 0 : i64, scratch_operands = 0 : i64, tpu.core_type = #tpu.core_type<tc>} {
    %c0 = arith.constant 0 : index
    %c0_0 = arith.constant 0 : index
    %0 = vector.load %arg0[%c0, %c0_0] : memref<8x16xf32, #tpu.memory_space<vmem>>, vector<8x16xf32>
    %c0_1 = arith.constant 0 : index
    %c0_2 = arith.constant 0 : index
    %c0_3 = arith.constant 0 : index
    %1 = vector.load %arg1[%c0_1, %c0_2, %c0_3] : memref<2x24x128xf32, #tpu.memory_space<vmem>>, vector<1x16x128xf32>
    %2 = vector.shape_cast %1 : vector<1x16x128xf32> to vector<16x128xf32>
    %cst = arith.constant dense<0.000000e+00> : vector<8x128xf32>
    %3 = tpu.matmul %0, %2, %cst {dimension_numbers = #tpu.dot_dimension_numbers<[1], [0], [0], [1], [0, 0, 1, 1], [], []>} : vector<8x16xf32>, vector<16x128xf32>, vector<8x128xf32> -> vector<8x128xf32>
    %c0_4 = arith.constant 0 : index
    %c0_5 = arith.constant 0 : index
    %4 = vector.load %arg2[%c0_4, %c0_5] : memref<6x128xf32, #tpu.memory_space<vmem>>, vector<1x128xf32>
    %c1 = arith.constant 1 : index
    %c0_6 = arith.constant 0 : index
    %5 = vector.load %arg2[%c1, %c0_6] : memref<6x128xf32, #tpu.memory_space<vmem>>, vector<1x128xf32>
    %cst_7 = arith.constant dense<0.000000e+00> : vector<128xf32>
    %6 = vector.multi_reduction <add>, %3, %cst_7 [0] : vector<8x128xf32> to vector<128xf32>
    %7 = vector.shape_cast %6 : vector<128xf32> to vector<1x128xf32>
    %8 = arith.mulf %3, %3 : vector<8x128xf32>
    %cst_8 = arith.constant dense<0.000000e+00> : vector<128xf32>
    %9 = vector.multi_reduction <add>, %8, %cst_8 [0] : vector<8x128xf32> to vector<128xf32>
    %10 = vector.shape_cast %9 : vector<128xf32> to vector<1x128xf32>
    %cst_9 = arith.constant 1.250000e-01 : f32
    %11 = vector.broadcast %cst_9 : f32 to vector<1x128xf32>
    %12 = arith.mulf %7, %11 : vector<1x128xf32>
    %cst_10 = arith.constant 1.250000e-01 : f32
    %13 = vector.broadcast %cst_10 : f32 to vector<1x128xf32>
    %14 = arith.mulf %10, %13 : vector<1x128xf32>
    %15 = arith.mulf %12, %12 : vector<1x128xf32>
    %16 = arith.subf %14, %15 : vector<1x128xf32>
    %cst_11 = arith.constant 0.000000e+00 : f32
    %17 = vector.broadcast %cst_11 : f32 to vector<1x128xf32>
    %18 = arith.maximumf %16, %17 : vector<1x128xf32>
    %cst_12 = arith.constant 9.99999974E-6 : f32
    %19 = vector.broadcast %cst_12 : f32 to vector<1x128xf32>
    %20 = arith.addf %18, %19 : vector<1x128xf32>
    %21 = math.rsqrt %20 : vector<1x128xf32>
    %22 = arith.mulf %4, %21 : vector<1x128xf32>
    %23 = arith.mulf %12, %22 : vector<1x128xf32>
    %24 = arith.subf %5, %23 : vector<1x128xf32>
    %25 = vector.broadcast %22 : vector<1x128xf32> to vector<8x128xf32>
    %26 = arith.mulf %3, %25 : vector<8x128xf32>
    %27 = vector.broadcast %24 : vector<1x128xf32> to vector<8x128xf32>
    %28 = arith.addf %26, %27 : vector<8x128xf32>
    %cst_13 = arith.constant 0.000000e+00 : f32
    %29 = vector.broadcast %cst_13 : f32 to vector<8x128xf32>
    %30 = arith.maximumf %28, %29 : vector<8x128xf32>
    %31 = vector.extract_strided_slice %30 {offsets = [0, 0], sizes = [8, 24], strides = [1, 1]} : vector<8x128xf32> to vector<8x24xf32>
    %c1_14 = arith.constant 1 : index
    %c0_15 = arith.constant 0 : index
    %c0_16 = arith.constant 0 : index
    %32 = vector.load %arg1[%c1_14, %c0_15, %c0_16] : memref<2x24x128xf32, #tpu.memory_space<vmem>>, vector<1x24x128xf32>
    %33 = vector.shape_cast %32 : vector<1x24x128xf32> to vector<24x128xf32>
    %cst_17 = arith.constant dense<0.000000e+00> : vector<8x128xf32>
    %34 = tpu.matmul %31, %33, %cst_17 {dimension_numbers = #tpu.dot_dimension_numbers<[1], [0], [0], [1], [0, 0, 1, 1], [], []>} : vector<8x24xf32>, vector<24x128xf32>, vector<8x128xf32> -> vector<8x128xf32>
    %c2 = arith.constant 2 : index
    %c0_18 = arith.constant 0 : index
    %35 = vector.load %arg2[%c2, %c0_18] : memref<6x128xf32, #tpu.memory_space<vmem>>, vector<1x128xf32>
    %c3 = arith.constant 3 : index
    %c0_19 = arith.constant 0 : index
    %36 = vector.load %arg2[%c3, %c0_19] : memref<6x128xf32, #tpu.memory_space<vmem>>, vector<1x128xf32>
    %cst_20 = arith.constant dense<0.000000e+00> : vector<128xf32>
    %37 = vector.multi_reduction <add>, %34, %cst_20 [0] : vector<8x128xf32> to vector<128xf32>
    %38 = vector.shape_cast %37 : vector<128xf32> to vector<1x128xf32>
    %39 = arith.mulf %34, %34 : vector<8x128xf32>
    %cst_21 = arith.constant dense<0.000000e+00> : vector<128xf32>
    %40 = vector.multi_reduction <add>, %39, %cst_21 [0] : vector<8x128xf32> to vector<128xf32>
    %41 = vector.shape_cast %40 : vector<128xf32> to vector<1x128xf32>
    %cst_22 = arith.constant 1.250000e-01 : f32
    %42 = vector.broadcast %cst_22 : f32 to vector<1x128xf32>
    %43 = arith.mulf %38, %42 : vector<1x128xf32>
    %cst_23 = arith.constant 1.250000e-01 : f32
    %44 = vector.broadcast %cst_23 : f32 to vector<1x128xf32>
    %45 = arith.mulf %41, %44 : vector<1x128xf32>
    %46 = arith.mulf %43, %43 : vector<1x128xf32>
    %47 = arith.subf %45, %46 : vector<1x128xf32>
    %cst_24 = arith.constant 0.000000e+00 : f32
    %48 = vector.broadcast %cst_24 : f32 to vector<1x128xf32>
    %49 = arith.maximumf %47, %48 : vector<1x128xf32>
    %cst_25 = arith.constant 9.99999974E-6 : f32
    %50 = vector.broadcast %cst_25 : f32 to vector<1x128xf32>
    %51 = arith.addf %49, %50 : vector<1x128xf32>
    %52 = math.rsqrt %51 : vector<1x128xf32>
    %53 = arith.mulf %35, %52 : vector<1x128xf32>
    %54 = arith.mulf %43, %53 : vector<1x128xf32>
    %55 = arith.subf %36, %54 : vector<1x128xf32>
    %56 = vector.broadcast %53 : vector<1x128xf32> to vector<8x128xf32>
    %57 = arith.mulf %34, %56 : vector<8x128xf32>
    %58 = vector.broadcast %55 : vector<1x128xf32> to vector<8x128xf32>
    %59 = arith.addf %57, %58 : vector<8x128xf32>
    %cst_26 = arith.constant 0.000000e+00 : f32
    %60 = vector.broadcast %cst_26 : f32 to vector<8x128xf32>
    %61 = arith.maximumf %59, %60 : vector<8x128xf32>
    %c4 = arith.constant 4 : index
    %c0_27 = arith.constant 0 : index
    %62 = vector.load %arg2[%c4, %c0_27] : memref<6x128xf32, #tpu.memory_space<vmem>>, vector<1x128xf32>
    %c5 = arith.constant 5 : index
    %c0_28 = arith.constant 0 : index
    %63 = vector.load %arg2[%c5, %c0_28] : memref<6x128xf32, #tpu.memory_space<vmem>>, vector<1x1xf32>
    %64 = vector.broadcast %62 : vector<1x128xf32> to vector<8x128xf32>
    %65 = arith.mulf %61, %64 : vector<8x128xf32>
    %cst_29 = arith.constant dense<0.000000e+00> : vector<8xf32>
    %66 = vector.multi_reduction <add>, %65, %cst_29 [1] : vector<8x128xf32> to vector<8xf32>
    %67 = vector.shape_cast %66 : vector<8xf32> to vector<8x1xf32>
    %68 = vector.broadcast %63 : vector<1x1xf32> to vector<8x1xf32>
    %69 = arith.addf %67, %68 : vector<8x1xf32>
    %c0_30 = arith.constant 0 : index
    %c0_31 = arith.constant 0 : index
    %70 = vector.load %arg3[%c0_30, %c0_31] : memref<8x1xf32, #tpu.memory_space<vmem>>, vector<8x1xf32>
    tpu.vector_store %arg3[%c0_30, %c0_31], %69 {strides = array<i32>} : memref<8x1xf32, #tpu.memory_space<vmem>>, vector<8x1xf32>,
    return
  }
}

</mosaic_0001>

<llo_original>
// kernel: tpu_custom_call.1
$region0: #{tpu_custom_call.1}
  #allocation0 [shape = 'u32[]', space=smem, size = 0x4, offset = 0x4, fixed_abs, tag = 'smem constant byte address 0x4 - core index']
  #allocation1 [shape = 'u32[144,128]{1,0:T(1,128)}', space=vmem, size = 0x12000, scoped, tag = 'internal scratch']
  %s0 = inlined_call_operand.hbm [shape: f32[8,16], index: 0, kind: input, shape index: {}]
  %s1 = inlined_call_operand.hbm [shape: f32[2,24,128], index: 1, kind: input, shape index: {}]
  %s2 = inlined_call_operand.hbm [shape: f32[6,128], index: 2, kind: input, shape index: {}]
  %s3 = inlined_call_operand.vmem [shape: f32[8,1], index: 3, kind: output, shape index: {}]
  %s4 = sld [smem:[#allocation0]]
  $region34: #{tpu_custom_call.1} parent=0
    _
  %s6 = ssub.s32 1, %s4
  %s7 = scalar_select 0, %s6, %s4
  $region1: #{tpu_custom_call.1} parent=0
    #allocation2 [shape = 'u8[4096]{0}', space=vmem, size = 0x1000, scoped, tag = 'input window, operand 0, single buffered']
    #allocation3 [shape = 's32[1]{0}', space=sflag, size = 0x4, scoped, tag = 'scoped memory for tpu_custom_call.1']
    #allocation4 [shape = 'u8[24576]{0}', space=vmem, size = 0x6000, scoped, tag = 'input window, operand 1, single buffered']
    #allocation5 [shape = 's32[1]{0}', space=sflag, size = 0x4, scoped, tag = 'scoped memory for tpu_custom_call.1']
    #allocation6 [shape = 'u8[4096]{0}', space=vmem, size = 0x1000, scoped, tag = 'input window, operand 2, single buffered']
    %8 = vsyncpa [#allocation3], 0
    %9 = vsyncpa [#allocation5], 0
    // Predicated region
    $region2: #{tpu_custom_call.1} parent=1 // pred_check
      _
    $region3: #{tpu_custom_call.1} parent=1 // pred_check_branch
      %11 = sbr.rel (0) target = $region5
    $region4: #{tpu_custom_call.1} parent=1 // pred_region
      %s13 = ssub.s32 128, 128
      %14 = vsyncadd [#allocation3], %s13
      %s16 = sshll.u32 [#allocation2], 4
      %s17 = int_to_ptr.vmem [resolvable:$true] %s16
      %19 = dma.hbm_to_vmem [thread:$0]  %s0, 128, %s17, [#allocation3]
    $region5: #{tpu_custom_call.1} parent=1 // pred_fallthru
      _
    // Predicated region
    $region6: #{tpu_custom_call.1} parent=1 // pred_check
      _
    $region7: #{tpu_custom_call.1} parent=1 // pred_check_branch
      %21 = sbr.rel (0) target = $region9
    $region8: #{tpu_custom_call.1} parent=1 // pred_region
      %s23 = ssub.s32 768, 768
      %24 = vsyncadd [#allocation5], %s23
      %s25 = sshll.u32 [#allocation4], 4
      %s26 = int_to_ptr.vmem [resolvable:$true] %s25
      %31 = dma.hbm_to_vmem [thread:$0]  %s1, 768, %s26, [#allocation5], 128, 128, 8
    $region9: #{tpu_custom_call.1} parent=1 // pred_fallthru
      _
    // Predicated region
    $region10: #{tpu_custom_call.1} parent=1 // pred_check
      _
    $region11: #{tpu_custom_call.1} parent=1 // pred_check_branch
      %33 = sbr.rel (0) target = $region13
    $region12: #{tpu_custom_call.1} parent=1 // pred_region
      %s35 = ssub.s32 128, 128
      %36 = vsyncadd [#allocation5], %s35
      %s38 = sshll.u32 [#allocation6], 4
      %s39 = int_to_ptr.vmem [resolvable:$true] %s38
      %41 = dma.hbm_to_vmem [thread:$0]  %s2, 128, %s39, [#allocation5]
    $region13: #{tpu_custom_call.1} parent=1 // pred_fallthru
      _
    // Predicated region
    $region14: #{tpu_custom_call.1} parent=1 // pred_check
      _
    $region15: #{tpu_custom_call.1} parent=1 // pred_check_branch
      %43 = sbr.rel (0) target = $region17
    $region16: #{tpu_custom_call.1} parent=1 // pred_region
      %44 = dma.done [#allocation3], 128
    $region17: #{tpu_custom_call.1} parent=1 // pred_fallthru
      _
    // Predicated region
    $region18: #{tpu_custom_call.1} parent=1 // pred_check
      _
    $region19: #{tpu_custom_call.1} parent=1 // pred_check_branch
      %46 = sbr.rel (0) target = $region21
    $region20: #{tpu_custom_call.1} parent=1 // pred_region
      %47 = dma.done [#allocation5], 768
    $region21: #{tpu_custom_call.1} parent=1 // pred_fallthru
      _
    // Predicated region
    $region22: #{tpu_custom_call.1} parent=1 // pred_check
      _
    $region23: #{tpu_custom_call.1} parent=1 // pred_check_branch
      %49 = sbr.rel (0) target = $region25
    $region24: #{tpu_custom_call.1} parent=1 // pred_region
      %50 = dma.done [#allocation5], 128
    $region25: #{tpu_custom_call.1} parent=1 // pred_fallthru
      _
    %v51 = vld [vmem:[#allocation2] sm:$0xff]
    %v52 = vld [vmem:[#allocation4] sm:$0xff]
    %v53 = vld [vmem:[#allocation4 + $0x8] sm:$0xff]
    %vm54 = vcmask 130048
    %v56 = vsel %vm54, %v51, 0
    %58 = vmatprep.subr.mxu0 0.0
    %59 = vmatpush1.msra.mxu0 %v52
    %60 = vmatprep.subr.mxu0 0.0
    %61 = vmatpush1.msra.mxu0 %v53
    %62 = vmatprep.subr.mxu0 0.0
    %63 = vmatpush1.msra.mxu0 0.0
    %64 = vmatprep.subr.mxu0 0.0
    %65 = vmatpush1.msra.mxu0 0.0
    %66 = vmatprep.subr.mxu0 0.0
    %67 = vmatpush1.msra.mxu0 0.0
    %68 = vmatprep.subr.mxu0 0.0
    %69 = vmatpush1.msra.mxu0 0.0
    %70 = vmatprep.subr.mxu0 0.0
    %71 = vmatpush1.msra.mxu0 0.0
    %72 = vmatprep.subr.mxu0 0.0
    %73 = vmatpush1.msra.mxu0 0.0
    %74 = vmatprep.subr.mxu0 0.0
    %75 = vmatpush1.msra.mxu0 0.0
    %76 = vmatprep.subr.mxu0 0.0
    %77 = vmatpush1.msra.mxu0 0.0
    %78 = vmatprep.subr.mxu0 0.0
    %79 = vmatpush1.msra.mxu0 0.0
    %80 = vmatprep.subr.mxu0 0.0
    %81 = vmatpush1.msra.mxu0 0.0
    %82 = vmatprep.subr.mxu0 0.0
    %83 = vmatpush1.msra.mxu0 0.0
    %84 = vmatprep.subr.mxu0 0.0
    %85 = vmatpush1.msra.mxu0 0.0
    %86 = vmatprep.subr.mxu0 0.0
    %87 = vmatpush1.msra.mxu0 0.0
    %88 = vmatprep.subr.mxu0 0.0
    %89 = vmatpush1.msra.mxu0 0.0
    %90 = vmatprep.subr.mxu0 0.0
    %91 = vmatpush1.msra.mxu0 0.0
    %92 = vmatprep.subr.mxu0 0.0
    %93 = vmatpush1.msra.mxu0 0.0
    %94 = vmatprep.subr.mxu0 0.0
    %95 = vmatpush1.msra.mxu0 0.0
    %96 = vmatprep.subr.mxu0 0.0
    %97 = vmatpush1.msra.mxu0 0.0
    %98 = vmatprep.subr.mxu0 0.0
    %99 = vmatpush1.msra.mxu0 0.0
    %100 = vmatprep.subr.mxu0 0.0
    %101 = vmatpush1.msra.mxu0 0.0
    %102 = vmatprep.subr.mxu0 0.0
    %103 = vmatpush1.msra.mxu0 0.0
    %104 = vmatprep.subr.mxu0 0.0
    %105 = vmatpush1.msra.mxu0 0.0
    %106 = vmatprep.subr.mxu0 0.0
    %107 = vmatpush1.msra.mxu0 0.0
    %108 = vmatprep.subr.mxu0 0.0
    %109 = vmatpush1.msra.mxu0 0.0
    %110 = vmatprep.subr.mxu0 0.0
    %111 = vmatpush1.msra.mxu0 0.0
    %112 = vmatprep.subr.mxu0 0.0
    %113 = vmatpush1.msra.mxu0 0.0
    %114 = vmatprep.subr.mxu0 0.0
    %115 = vmatpush1.msra.mxu0 0.0
    %116 = vmatprep.subr.mxu0 0.0
    %117 = vmatpush1.msra.mxu0 0.0
    %118 = vmatprep.subr.mxu0 0.0
    %119 = vmatpush1.msra.mxu0 0.0
    %120 = vmatprep.subr.mxu0 0.0
    %121 = vmatpush1.msra.mxu0 0.0
    %122 = vmatprep.mubr.f32.mxu0 0.0
    %123 = vmatmul.mubr.f32.gmra.mrb[0].mxu0 %v56
    %v124 = vpop.f32.mrb[0].mxu0
    %v125 = vadd.f32 0.0, %v124
    %v126 = vpop.f32.mrb[0].mxu0
    %127 = vdwg.mxu0
    %v128 = vld [vmem:[#allocation6] sm:$0x1]
    %v129 = vld [vmem:[#allocation6 + $0x1] sm:$0x1]
    %v130 = vrot.slane %v125, 4
    %v131 = vadd.f32 %v125, %v130
    %v132 = vrot.slane %v131, 2
    %v133 = vadd.f32 %v131, %v132
    %v134 = vrot.slane %v133, 1
    %v135 = vadd.f32 %v133, %v134
    %v136 = vmul.f32 %v125, %v125
    %v137 = vrot.slane %v136, 4
    %v138 = vadd.f32 %v136, %v137
    %v139 = vrot.slane %v138, 2
    %v140 = vadd.f32 %v138, %v139
    %v141 = vrot.slane %v140, 1
    %v142 = vadd.f32 %v140, %v141
    %v143 = vmul.f32 %v135, 0.125
    %v144 = vmul.f32 %v142, 0.125
    %v145 = vmul.f32 %v143, %v143
    %v146 = vsub.f32 %v144, %v145
    %v147 = vmax.f32 %v146, 0.0
    %v148 = vadd.f32 %v147, 1e-05
    %v149 = vrsqrt.pop %v148
    %v150 = vmul.f32 %v128, %v149
    %v151 = vmul.f32 %v143, %v150
    %v152 = vsub.f32 %v129, %v151
    %v153 = vlaneseq
    %v154 = vshrl.u32 %v153, 7
    %v155 = vsub.s32 0, %v154
    %v156 = vrot.slane %v150, %v155
    %v157 = vmul.f32 %v125, %v156
    %v158 = vlaneseq
    %v159 = vshrl.u32 %v158, 7
    %v160 = vsub.s32 0, %v159
    %v161 = vrot.slane %v152, %v160
    %v162 = vadd.f32 %v157, %v161
    %v163 = vmax.f32 %v162, 0.0
    %s164 = scalar_lea.vmem [#allocation4], 24
    %v165 = vld [vmem:[%s164] sm:$0xff]
    %v166 = vld [vmem:[%s164 + $0x8] sm:$0xff]
    %v167 = vld [vmem:[%s164 + $0x10] sm:$0xff]
    %vm168 = vcmask 195584
    %v170 = vsel %vm168, %v163, 0
    %172 = vmatprep.subr.mxu0 0.0
    %173 = vmatpush1.msra.mxu0 %v165
    %174 = vmatprep.subr.mxu0 0.0
    %175 = vmatpush1.msra.mxu0 %v166
    %176 = vmatprep.subr.mxu0 0.0
    %177 = vmatpush1.msra.mxu0 %v167
    %178 = vmatprep.subr.mxu0 0.0
    %179 = vmatpush1.msra.mxu0 0.0
    %180 = vmatprep.subr.mxu0 0.0
    %181 = vmatpush1.msra.mxu0 0.0
    %182 = vmatprep.subr.mxu0 0.0
    %183 = vmatpush1.msra.mxu0 0.0
    %184 = vmatprep.subr.mxu0 0.0
    %185 = vmatpush1.msra.mxu0 0.0
    %186 = vmatprep.subr.mxu0 0.0
    %187 = vmatpush1.msra.mxu0 0.0
    %188 = vmatprep.subr.mxu0 0.0
    %189 = vmatpush1.msra.mxu0 0.0
    %190 = vmatprep.subr.mxu0 0.0
    %191 = vmatpush1.msra.mxu0 0.0
    %192 = vmatprep.subr.mxu0 0.0
    %193 = vmatpush1.msra.mxu0 0.0
    %194 = vmatprep.subr.mxu0 0.0
    %195 = vmatpush1.msra.mxu0 0.0
    %196 = vmatprep.subr.mxu0 0.0
    %197 = vmatpush1.msra.mxu0 0.0
    %198 = vmatprep.subr.mxu0 0.0
    %199 = vmatpush1.msra.mxu0 0.0
    %200 = vmatprep.subr.mxu0 0.0
    %201 = vmatpush1.msra.mxu0 0.0
    %202 = vmatprep.subr.mxu0 0.0
    %203 = vmatpush1.msra.mxu0 0.0
    %204 = vmatprep.subr.mxu0 0.0
    %205 = vmatpush1.msra.mxu0 0.0
    %206 = vmatprep.subr.mxu0 0.0
    %207 = vmatpush1.msra.mxu0 0.0
    %208 = vmatprep.subr.mxu0 0.0
    %209 = vmatpush1.msra.mxu0 0.0
    %210 = vmatprep.subr.mxu0 0.0
    %211 = vmatpush1.msra.mxu0 0.0
    %212 = vmatprep.subr.mxu0 0.0
    %213 = vmatpush1.msra.mxu0 0.0
    %214 = vmatprep.subr.mxu0 0.0
    %215 = vmatpush1.msra.mxu0 0.0
    %216 = vmatprep.subr.mxu0 0.0
    %217 = vmatpush1.msra.mxu0 0.0
    %218 = vmatprep.subr.mxu0 0.0
    %219 = vmatpush1.msra.mxu0 0.0
    %220 = vmatprep.subr.mxu0 0.0
    %221 = vmatpush1.msra.mxu0 0.0
    %222 = vmatprep.subr.mxu0 0.0
    %223 = vmatpush1.msra.mxu0 0.0
    %224 = vmatprep.subr.mxu0 0.0
    %225 = vmatpush1.msra.mxu0 0.0
    %226 = vmatprep.subr.mxu0 0.0
    %227 = vmatpush1.msra.mxu0 0.0
    %228 = vmatprep.subr.mxu0 0.0
    %229 = vmatpush1.msra.mxu0 0.0
    %230 = vmatprep.subr.mxu0 0.0
    %231 = vmatpush1.msra.mxu0 0.0
    %232 = vmatprep.subr.mxu0 0.0
    %233 = vmatpush1.msra.mxu0 0.0
    %234 = vmatprep.subr.mxu0 0.0
    %235 = vmatpush1.msra.mxu0 0.0
    %236 = vmatprep.mubr.f32.mxu0 0.0
    %237 = vmatmul.mubr.f32.gmra.mrb[0].mxu0 %v170
    %v238 = vpop.f32.mrb[0].mxu0
    %v239 = vadd.f32 0.0, %v238
    %v240 = vpop.f32.mrb[0].mxu0
    %241 = vdwg.mxu0
    %v242 = vld [vmem:[#allocation6 + $0x2] sm:$0x1]
    %v243 = vld [vmem:[#allocation6 + $0x3] sm:$0x1]
    %v244 = vrot.slane %v239, 4
    %v245 = vadd.f32 %v239, %v244
    %v246 = vrot.slane %v245, 2
    %v247 = vadd.f32 %v245, %v246
    %v248 = vrot.slane %v247, 1
    %v249 = vadd.f32 %v247, %v248
    %v250 = vmul.f32 %v239, %v239
    %v251 = vrot.slane %v250, 4
    %v252 = vadd.f32 %v250, %v251
    %v253 = vrot.slane %v252, 2
    %v254 = vadd.f32 %v252, %v253
    %v255 = vrot.slane %v254, 1
    %v256 = vadd.f32 %v254, %v255
    %v257 = vmul.f32 %v249, 0.125
    %v258 = vmul.f32 %v256, 0.125
    %v259 = vmul.f32 %v257, %v257
    %v260 = vsub.f32 %v258, %v259
    %v261 = vmax.f32 %v260, 0.0
    %v262 = vadd.f32 %v261, 1e-05
    %v263 = vrsqrt.pop %v262
    %v264 = vmul.f32 %v242, %v263
    %v265 = vmul.f32 %v257, %v264
    %v266 = vsub.f32 %v243, %v265
    %v267 = vlaneseq
    %v268 = vshrl.u32 %v267, 7
    %v269 = vsub.s32 0, %v268
    %v270 = vrot.slane %v264, %v269
    %v271 = vmul.f32 %v239, %v270
    %v272 = vlaneseq
    %v273 = vshrl.u32 %v272, 7
    %v274 = vsub.s32 0, %v273
    %v275 = vrot.slane %v266, %v274
    %v276 = vadd.f32 %v271, %v275
    %v277 = vmax.f32 %v276, 0.0
    %v278 = vld [vmem:[#allocation6 + $0x4] sm:$0x1]
    %v279 = vld [vmem:[#allocation6 + $0x5] sm:$0x1]
    %v280 = vlaneseq
    %v281 = vshrl.u32 %v280, 7
    %v282 = vsub.s32 0, %v281
    %v283 = vrot.slane %v278, %v282
    %v284 = vmul.f32 %v277, %v283
    %285 = vadd.xlane.f32.xlu0 %v284
    %v286 = vpop.xlane.xlu0 %285
    %v287 = vlaneseq
    %v288 = vshrl.u32 %v287, 7
    %v289 = vsub.s32 0, %v288
    %v290 = vrot.slane %v279, %v289
    %v291 = vadd.f32 %v286, %v290
    %vm292 = vcmask 7168
    %293 = vst.msk [vmem:[%s3] sm:$0xff] %vm292, %v291
    // Predicated region
    $region26: #{tpu_custom_call.1} parent=1 // pred_check
      _
    $region27: #{tpu_custom_call.1} parent=1 // pred_check_branch
      %295 = sbr.rel (0) target = $region29
    $region28: #{tpu_custom_call.1} parent=1 // pred_region
      _
    $region29: #{tpu_custom_call.1} parent=1 // pred_fallthru
      _
    // Predicated region
    $region30: #{tpu_custom_call.1} parent=1 // pred_check
      _
    $region31: #{tpu_custom_call.1} parent=1 // pred_check_branch
      %297 = sbr.rel (0) target = $region33
    $region32: #{tpu_custom_call.1} parent=1 // pred_region
      _
    $region33: #{tpu_custom_call.1} parent=1 // pred_fallthru
      _
    %298 = vsyncpa [#allocation3], 1
    %299 = vsyncpa [#allocation5], 1

</llo_original>
